<compile_context>
chip_gen: v6e
topology: v6e:2x2x1
jax: 0.10.0
libtpu: 0.0.40
codegen_flags: <defaults>
</compile_context>

<pallas_src>
import math
import functools

import jax
import jax.numpy as jnp
from jax import lax
from jax.experimental import pallas as pl
from jax.experimental.pallas import tpu as pltpu


def make_pe_table(max_len: int, d_model: int) -> jnp.ndarray:
    """Sinusoidal table, shape (max_len, 1, d_model) == the PyTorch buffer `pe`."""
    position = jnp.arange(max_len, dtype=jnp.float32)[:, None]              # (L, 1)
    div_term = jnp.exp(
        jnp.arange(0, d_model, 2, dtype=jnp.float32) * (-math.log(10000.0) / d_model)
    )                                                                        # (D/2,)
    pe = jnp.zeros((max_len, d_model), dtype=jnp.float32)
    pe = pe.at[:, 0::2].set(jnp.sin(position * div_term))
    pe = pe.at[:, 1::2].set(jnp.cos(position * div_term))
    return pe[:, None, :]                                                    # (L, 1, D)


def _pe_add_dropout_kernel(seed_ref, x_ref, pe_ref, o_ref, *,
                           p: float, training: bool, batch: int, d_model: int):
    tile_s = x_ref.shape[0]
    # Upcast to f32 for the add/mask math. bf16 I/O still halves HBM bytes; v5e has
    # no bf16 VALU so f32 compute is the portable choice (VALU has slack: mem-bound).
    y = x_ref[...].astype(jnp.float32) + pe_ref[...].astype(jnp.float32)   # (tS,B,D)+(tS,1,D)

    if training and p >= 1.0:
        y = jnp.zeros_like(y)
    elif training and p > 0.0:
        i32, u32 = jnp.int32, jnp.uint32
        shape = x_ref.shape
        # Global element index (decorrelated across tiles / parallel cores by design).
        s_idx = lax.broadcasted_iota(i32, shape, 0) + pl.program_id(0) * tile_s
        b_idx = lax.broadcasted_iota(i32, shape, 1)
        d_idx = lax.broadcasted_iota(i32, shape, 2)
        flat = (s_idx * batch + b_idx) * d_model + d_idx
        mixed = flat + seed_ref[0] * i32(0x3504F333)          # inject runtime seed
        z = lax.bitcast_convert_type(mixed, u32)
        # lowbias32-style integer mix — pure VPU ops, no TPU-only PRNG primitives.
        z = z ^ (z >> 16)
        z = z * u32(0x7FEB352D)
        z = z ^ (z >> 15)
        z = z * u32(0x846CA68B)
        z = z ^ (z >> 16)
        # Keep with prob (1 - p): compare raw bits against an integer threshold.
        threshold = u32(min(int(round(p * 2.0 ** 32)), 2 ** 32 - 1))
        keep = z >= threshold
        y = jnp.where(keep, y * jnp.float32(1.0 / (1.0 - p)), jnp.float32(0.0))
        # TODO(synk): matches nn.Dropout semantics (keep prob, 1/(1-p) scaling) but
        # will not bit-match PyTorch's RNG stream.

    o_ref[...] = y.astype(o_ref.dtype)


def _choose_tile_s(S, B, D, itemsize, target_bytes=8 * 1024 * 1024):
    """Rows of x per tile so one buffered tile is ~8 MiB (fits v7x 64 MiB VMEM)."""
    rows = target_bytes // max(1, B * D * itemsize)
    if rows >= S:
        return S
    return max(1, int(rows))


def positional_encoding_forward(x, pe_table, *, p=0.1, training=False, seed=0,
                                tile_s=None):
    """x: (S, B, D). pe_table: (max_len, 1, D). Returns dropout(x + pe[:S])."""
    S, B, D = x.shape
    pe_slice = pe_table[:S].astype(x.dtype)          # (S, 1, D) == self.pe[:x.size(0), :]
    seed_arr = jnp.asarray([seed], dtype=jnp.int32)

    itemsize = jnp.dtype(x.dtype).itemsize
    if tile_s is None:
        tile_s = _choose_tile_s(S, B, D, itemsize)
    tile_s = min(int(tile_s), S)
    grid = (pl.cdiv(S, tile_s),)

    kernel = functools.partial(_pe_add_dropout_kernel, p=float(p),
                               training=bool(training), batch=B, d_model=D)

    extra = {}
    cp_cls = getattr(pltpu, "CompilerParams", None)
    if cp_cls is not None:
        extra["compiler_params"] = cp_cls(
            dimension_semantics=("parallel",),          # seq tiles are independent
            vmem_limit_bytes=48 * 1024 * 1024,
        )
    if hasattr(pl, "CostEstimate"):
        extra["cost_estimate"] = pl.CostEstimate(
            flops=2 * S * B * D,
            transcendentals=0,
            bytes_accessed=(2 * S * B * D + S * D) * itemsize,
        )

    return pl.pallas_call(
        kernel,
        out_shape=jax.ShapeDtypeStruct((S, B, D), x.dtype),
        grid=grid,
        in_specs=[
            pl.BlockSpec(memory_space=pltpu.SMEM),                       # seed scalar
            pl.BlockSpec((tile_s, B, D), lambda i: (i, 0, 0),
                         memory_space=pltpu.VMEM),                       # x tile
            pl.BlockSpec((tile_s, 1, D), lambda i: (i, 0, 0),
                         memory_space=pltpu.VMEM),                       # pe tile
        ],
        out_specs=pl.BlockSpec((tile_s, B, D), lambda i: (i, 0, 0),
                               memory_space=pltpu.VMEM),
        **extra,
    )(seed_arr, x, pe_slice)


if __name__ == "__main__":
    # Small shapes consistent with the module's forward: x is (seq, batch, d_model).
    S, B, D = 8, 2, 32
    MAX_LEN = 64
    key = jax.random.PRNGKey(0)
    x = jax.random.normal(key, (S, B, D), dtype=jnp.float32)
    pe_table = make_pe_table(MAX_LEN, D)

    # Eval mode (dropout = identity): must match the plain-JAX broadcast add.
    # tile_s=4 forces grid=(2,) so the multi-tile path is exercised.
    out_eval = jax.block_until_ready(
        positional_encoding_forward(x, pe_table, p=0.1, training=False, tile_s=4))
    ref = x + pe_table[:S]
    assert out_eval.shape == (S, B, D)
    assert jnp.allclose(out_eval, ref, atol=1e-5, rtol=1e-5), "mismatch vs reference"

    # Training mode: every element must be either 0 (dropped) or ref/(1-p) (kept).
    p = 0.1
    out_train = jax.block_until_ready(
        positional_encoding_forward(x, pe_table, p=p, training=True, seed=123, tile_s=4))
    assert out_train.shape == (S, B, D)
    scale = 1.0 / (1.0 - p)
    dropped = jnp.isclose(out_train, 0.0, atol=1e-6)
    kept = jnp.isclose(out_train, ref * scale, atol=1e-4, rtol=1e-4)
    assert bool(jnp.all(dropped | kept)), "dropout output is not {0, scaled} valued"
    assert float(jnp.mean(kept.astype(jnp.float32))) > 0.0, "everything was dropped"

    print("KERNEL_OK")
</pallas_src>

<mosaic_0001>
module attributes {stable_mosaic.version = 11 : i64} {
  func.func @_pe_add_dropout_kernel(%arg0: i32, %arg1: memref<1xi32, #tpu.memory_space<smem>>, %arg2: memref<4x2x32xf32, #tpu.memory_space<vmem>>, %arg3: memref<4x1x32xf32, #tpu.memory_space<vmem>>, %arg4: memref<4x2x32xf32, #tpu.memory_space<vmem>>) attributes {dimension_semantics = [#tpu.dimension_semantics<parallel>], iteration_bounds = array<i64: 2>, scalar_prefetch = 0 : i64, scratch_operands = 0 : i64, tpu.core_type = #tpu.core_type<tc>, window_params = [{transform_indices = @transform_0, window_bounds = array<i64: 1>}, {transform_indices = @transform_1, window_bounds = array<i64: 4, 2, 32>}, {transform_indices = @transform_2, window_bounds = array<i64: 4, 1, 32>}, {transform_indices = @transform_3, window_bounds = array<i64: 4, 2, 32>}]} {
    %c0 = arith.constant 0 : index
    %c0_0 = arith.constant 0 : index
    %c0_1 = arith.constant 0 : index
    %0 = vector.load %arg2[%c0, %c0_0, %c0_1] : memref<4x2x32xf32, #tpu.memory_space<vmem>>, vector<4x2x32xf32>
    %c0_2 = arith.constant 0 : index
    %c0_3 = arith.constant 0 : index
    %c0_4 = arith.constant 0 : index
    %1 = vector.load %arg3[%c0_2, %c0_3, %c0_4] : memref<4x1x32xf32, #tpu.memory_space<vmem>>, vector<4x1x32xf32>
    %2 = vector.broadcast %1 : vector<4x1x32xf32> to vector<4x2x32xf32>
    %3 = arith.addf %0, %2 : vector<4x2x32xf32>
    %c0_5 = arith.constant 0 : index
    %c0_6 = arith.constant 0 : index
    %c0_7 = arith.constant 0 : index
    %4 = vector.load %arg4[%c0_5, %c0_6, %c0_7] : memref<4x2x32xf32, #tpu.memory_space<vmem>>, vector<4x2x32xf32>
    tpu.vector_store %arg4[%c0_5, %c0_6, %c0_7], %3 {strides = array<i32>} : memref<4x2x32xf32, #tpu.memory_space<vmem>>, vector<4x2x32xf32>,
    return
  }
  func.func @transform_0(%arg0: i32) -> i32 {
    %c0_i32 = arith.constant 0 : i32
    %c0_i32_0 = arith.constant 0 : i32
    return %c0_i32 : i32
  }
  func.func @transform_1(%arg0: i32) -> (i32, i32, i32) {
    %c0_i32 = arith.constant 0 : i32
    %c0_i32_0 = arith.constant 0 : i32
    %c0_i32_1 = arith.constant 0 : i32
    return %arg0, %c0_i32, %c0_i32_0 : i32, i32, i32
  }
  func.func @transform_2(%arg0: i32) -> (i32, i32, i32) {
    %c0_i32 = arith.constant 0 : i32
    %c0_i32_0 = arith.constant 0 : i32
    %c0_i32_1 = arith.constant 0 : i32
    return %arg0, %c0_i32, %c0_i32_0 : i32, i32, i32
  }
  func.func @transform_3(%arg0: i32) -> (i32, i32, i32) {
    %c0_i32 = arith.constant 0 : i32
    %c0_i32_0 = arith.constant 0 : i32
    %c0_i32_1 = arith.constant 0 : i32
    return %arg0, %c0_i32, %c0_i32_0 : i32, i32, i32
  }
}

</mosaic_0001>

<llo_original>
// kernel: tpu_custom_call.1
$region0: #{tpu_custom_call.1}
  #allocation0 [shape = 'u32[]', space=smem, size = 0x4, offset = 0x4, fixed_abs, tag = 'smem constant byte address 0x4 - core index']
  #allocation1 [shape = 'u32[144,128]{1,0:T(1,128)}', space=vmem, size = 0x12000, scoped, tag = 'internal scratch']
  #allocation2 [shape = 's32[1]{0:T(128)S(6)}', space=smem, size = 0x200, scoped, tag = 'scoped memory for tpu_custom_call.1']
  %s0 = inlined_call_operand.<no memory space> [shape: s32[1], index: 0, kind: input, shape index: {}]
  %s1 = inlined_call_operand.hbm [shape: f32[8,2,32], index: 1, kind: input, shape index: {}]
  %s2 = inlined_call_operand.hbm [shape: f32[8,1,32], index: 2, kind: input, shape index: {}]
  %s3 = inlined_call_operand.hbm [shape: f32[8,2,32], index: 3, kind: output, shape index: {}]
  %s4 = sld [smem:[#allocation0]]
  $region53: #{tpu_custom_call.1} parent=0
    _
  %s6 = ssub.s32 1, %s4
  %s7 = scalar_select 0, %s6, %s4
  %8 = sst [smem:[#allocation2]] %s0
  $region1: #{tpu_custom_call.1} parent=0
    #allocation3 [shape = 'u8[8192]{0}', space=vmem, size = 0x2000, scoped, tag = 'input window, operand 1']
    #allocation4 [shape = 's32[2]{0}', space=sflag, size = 0x8, scoped, tag = 'scoped memory for tpu_custom_call.1']
    #allocation5 [shape = 's32[2]{0}', space=sflag, size = 0x8, scoped, tag = 'scoped memory for tpu_custom_call.1']
    #allocation6 [shape = 'u8[4096]{0}', space=vmem, size = 0x1000, scoped, tag = 'input window, operand 2']
    #allocation7 [shape = 's32[2]{0}', space=sflag, size = 0x8, scoped, tag = 'scoped memory for tpu_custom_call.1']
    #allocation8 [shape = 'u8[8192]{0}', space=vmem, size = 0x2000, scoped, tag = 'output window, operand 0']
    %9 = vsyncpa [#allocation4], 0
    %s10 = scalar_lea.sflag [#allocation4], 1
    %11 = vsyncpa %s10, 0
    %12 = vsyncpa [#allocation7], 0
    %s13 = scalar_lea.sflag [#allocation7], 1
    %14 = vsyncpa %s13, 0
    %15 = vsyncpa [#allocation5], 0
    %s16 = scalar_lea.sflag [#allocation5], 1
    %17 = vsyncpa %s16, 0
    loop: start=0, step=1, limit=4
    $region2: #{tpu_custom_call.1} parent=1 // loop_pre_header
      _
    $region3: #{tpu_custom_call.1} parent=1 // loop_header
      %s19 = sphi 0, %s23
      %p20 = scmp.ge.s32.totalorder %s19, 4
      %s27 = sphi 0, %s27
      %s29 = sphi 0, %s27
      %s30 = sphi 0, %s29
      %s44 = sphi 0, %s30
      %s50 = sphi 0, %s52
      %s53 = sphi 0, %s50
      %s54 = sphi 0, %s53
      %s70 = sphi 0, %s54
      %s76 = sphi 0, %s78
      %s79 = sphi 0, %s76
      %s80 = sphi 0, %s79
      %s96 = sphi 0, %s80
      %s102 = sphi 0, %s104
      %s105 = sphi 0, %s102
      %s106 = sphi 0, %s105
      %s122 = sphi 0, %s106
    $region4: #{tpu_custom_call.1} parent=1 // loop_header_branch
      %22 = sbr.rel (%p20) target = $region8
    $region5: #{tpu_custom_call.1} parent=1 // loop_body
      %s24 = ssub.s32 %s19, 1
      %s25 = ssub.s32 %s19, 2
      %s26 = sadd.s32 %s19, 1
      %s28 = sadd.s32 %s27, 1
      %p31 = scmp.eq.s32.totalorder %s19, 1
      %p32 = scmp.ne.s32.totalorder %s27, %s29
      %p33 = scmp.eq.s32.totalorder %s19, 0
      %p34 = por %p32, %p33
      %p35 = scmp.ne.s32.totalorder %s27, %s29
      %p36 = scmp.eq.s32.totalorder %s24, 1
      %p37 = por %p35, %p36
      %p38 = scmp.ne.s32.totalorder %s29, %s30
      %p39 = scmp.eq.s32.totalorder %s24, 0
      %p40 = por %p38, %p39
      %p41 = scmp.ne.s32.totalorder %s29, %s30
      %p42 = scmp.eq.s32.totalorder %s25, 1
      %p43 = por %p41, %p42
      %p45 = scmp.ne.s32.totalorder %s30, %s44
      %p46 = scmp.eq.s32.totalorder %s25, 0
      %p47 = por %p45, %p46
      %s48 = ssub.s32 %s19, %s26
      %p49 = scmp.eq.s32.totalorder %s48, 0
      %s51 = sadd.s32 %s50, 1
      %s52 = scalar_select %p49, %s50, %s51
      %p55 = pneg %p49
      %p56 = scmp.eq.s32.totalorder %s19, 1
      %p57 = por %p55, %p56
      %p58 = scmp.ne.s32.totalorder %s50, %s53
      %p59 = scmp.eq.s32.totalorder %s19, 0
      %p60 = por %p58, %p59
      %p61 = scmp.ne.s32.totalorder %s50, %s53
      %p62 = scmp.eq.s32.totalorder %s24, 1
      %p63 = por %p61, %p62
      %p64 = scmp.ne.s32.totalorder %s53, %s54
      %p65 = scmp.eq.s32.totalorder %s24, 0
      %p66 = por %p64, %p65
      %p67 = scmp.ne.s32.totalorder %s53, %s54
      %p68 = scmp.eq.s32.totalorder %s25, 1
      %p69 = por %p67, %p68
      %p71 = scmp.ne.s32.totalorder %s54, %s70
      %p72 = scmp.eq.s32.totalorder %s25, 0
      %p73 = por %p71, %p72
      %s74 = ssub.s32 %s19, %s26
      %p75 = scmp.eq.s32.totalorder %s74, 0
      %s77 = sadd.s32 %s76, 1
      %s78 = scalar_select %p75, %s76, %s77
      %p81 = pneg %p75
      %p82 = scmp.eq.s32.totalorder %s19, 1
      %p83 = por %p81, %p82
      %p84 = scmp.ne.s32.totalorder %s76, %s79
      %p85 = scmp.eq.s32.totalorder %s19, 0
      %p86 = por %p84, %p85
      %p87 = scmp.ne.s32.totalorder %s76, %s79
      %p88 = scmp.eq.s32.totalorder %s24, 1
      %p89 = por %p87, %p88
      %p90 = scmp.ne.s32.totalorder %s79, %s80
      %p91 = scmp.eq.s32.totalorder %s24, 0
      %p92 = por %p90, %p91
      %p93 = scmp.ne.s32.totalorder %s79, %s80
      %p94 = scmp.eq.s32.totalorder %s25, 1
      %p95 = por %p93, %p94
      %p97 = scmp.ne.s32.totalorder %s80, %s96
      %p98 = scmp.eq.s32.totalorder %s25, 0
      %p99 = por %p97, %p98
      %s100 = ssub.s32 %s19, %s26
      %p101 = scmp.eq.s32.totalorder %s100, 0
      %s103 = sadd.s32 %s102, 1
      %s104 = scalar_select %p101, %s102, %s103
      %p107 = pneg %p101
      %p108 = scmp.eq.s32.totalorder %s19, 1
      %p109 = por %p107, %p108
      %p110 = scmp.ne.s32.totalorder %s102, %s105
      %p111 = scmp.eq.s32.totalorder %s19, 0
      %p112 = por %p110, %p111
      %p113 = scmp.ne.s32.totalorder %s102, %s105
      %p114 = scmp.eq.s32.totalorder %s24, 1
      %p115 = por %p113, %p114
      %p116 = scmp.ne.s32.totalorder %s105, %s106
      %p117 = scmp.eq.s32.totalorder %s24, 0
      %p118 = por %p116, %p117
      %p119 = scmp.ne.s32.totalorder %s105, %s106
      %p120 = scmp.eq.s32.totalorder %s25, 1
      %p121 = por %p119, %p120
      %p123 = scmp.ne.s32.totalorder %s106, %s122
      %p124 = scmp.eq.s32.totalorder %s25, 0
      %p125 = por %p123, %p124
      %p126 = scmp.le.s32.totalorder 1, %s19
      %p127 = scmp.lt.s32.totalorder %s19, 3
      %p128 = pnand %p126, %p127
      %p129 = pneg %p128
      // Predicated region
      $region9: #{tpu_custom_call.1} parent=5 // pred_check
        _
      $region10: #{tpu_custom_call.1} parent=5 // pred_check_branch
        %131 = sbr.rel (%p128) target = $region12
      $region11: #{tpu_custom_call.1} parent=5 // pred_region
        %s132 = ssub.s32 %s19, 1
        // Predicated region
        $region13: #{tpu_custom_call.1} parent=11 // pred_check
          %p133 = pneg %p40
        $region14: #{tpu_custom_call.1} parent=11 // pred_check_branch
          %135 = sbr.rel (%p133) target = $region16
        $region15: #{tpu_custom_call.1} parent=11 // pred_region
          _
        $region16: #{tpu_custom_call.1} parent=11 // pred_fallthru
          _
      $region12: #{tpu_custom_call.1} parent=5 // pred_fallthru
        _
      %p136 = scmp.lt.s32.totalorder %s19, 2
      // Predicated region
      $region17: #{tpu_custom_call.1} parent=5 // pred_check
        %p137 = pneg %p136
      $region18: #{tpu_custom_call.1} parent=5 // pred_check_branch
        %139 = sbr.rel (%p137) target = $region20
      $region19: #{tpu_custom_call.1} parent=5 // pred_region
        // Predicated region
        $region21: #{tpu_custom_call.1} parent=19 // pred_check
          %p140 = pneg %p60
        $region22: #{tpu_custom_call.1} parent=19 // pred_check_branch
          %142 = sbr.rel (%p140) target = $region24
        $region23: #{tpu_custom_call.1} parent=19 // pred_region
          %s143 = sand.u32 %s50, 1
          %s144 = scalar_lea.sflag [#allocation4], %s143
          %s145 = sand.u32 %s50, 1
          %s146 = smul.addr %s145, 8
          %s147 = scalar_lea.vmem [#allocation3], %s146
          %s148 = smul.u32 4, %s19
          %s150 = ssub.s32 128, 128
          %151 = vsyncadd %s144, %s150
          %s152 = smul.addr %s148, 32
          %s153 = scalar_lea.hbm %s1, %s152
          %s154 = sshll.u32 %s147, 4
          %s155 = int_to_ptr.vmem [resolvable:$true] %s154
          %160 = dma.hbm_to_vmem [thread:$0]  %s153, 128, %s155, %s144, 32, 32, 2
        $region24: #{tpu_custom_call.1} parent=19 // pred_fallthru
          _
        // Predicated region
        $region25: #{tpu_custom_call.1} parent=19 // pred_check
          %p161 = pneg %p86
        $region26: #{tpu_custom_call.1} parent=19 // pred_check_branch
          %163 = sbr.rel (%p161) target = $region28
        $region27: #{tpu_custom_call.1} parent=19 // pred_region
          %s164 = sand.u32 %s76, 1
          %s165 = scalar_lea.sflag [#allocation7], %s164
          %s166 = sand.u32 %s76, 1
          %s167 = smul.addr %s166, 4
          %s168 = scalar_lea.vmem [#allocation6], %s167
          %s169 = smul.u32 4, %s19
          %s171 = ssub.s32 64, 64
          %172 = vsyncadd %s165, %s171
          %s173 = smul.addr %s169, 16
          %s174 = scalar_lea.hbm %s2, %s173
          %s175 = sshll.u32 %s168, 4
          %s176 = int_to_ptr.vmem [resolvable:$true] %s175
          %181 = dma.hbm_to_vmem [thread:$0]  %s174, 64, %s176, %s165, 16, 16, 1
        $region28: #{tpu_custom_call.1} parent=19 // pred_fallthru
          _
      $region20: #{tpu_custom_call.1} parent=5 // pred_fallthru
        _
      %p182 = scmp.le.s32.totalorder 1, %s19
      %p183 = scmp.lt.s32.totalorder %s19, 3
      %p184 = pnand %p182, %p183
      %p185 = pneg %p184
      // Predicated region
      $region29: #{tpu_custom_call.1} parent=5 // pred_check
        _
      $region30: #{tpu_custom_call.1} parent=5 // pred_check_branch
        %187 = sbr.rel (%p184) target = $region32
      $region31: #{tpu_custom_call.1} parent=5 // pred_region
        %s188 = ssub.s32 %s19, 1
        %s189 = sand.u32 %s53, 1
        %s190 = scalar_lea.sflag [#allocation4], %s189
        %s191 = sand.u32 %s53, 1
        %s192 = smul.addr %s191, 8
        %s193 = scalar_lea.vmem [#allocation3], %s192
        // Predicated region
        $region33: #{tpu_custom_call.1} parent=31 // pred_check
          %p194 = pneg %p66
        $region34: #{tpu_custom_call.1} parent=31 // pred_check_branch
          %196 = sbr.rel (%p194) target = $region36
        $region35: #{tpu_custom_call.1} parent=31 // pred_region
          %197 = dma.done %s190, 128
        $region36: #{tpu_custom_call.1} parent=31 // pred_fallthru
          _
        %s198 = sand.u32 %s79, 1
        %s199 = scalar_lea.sflag [#allocation7], %s198
        %s200 = sand.u32 %s79, 1
        %s201 = smul.addr %s200, 4
        %s202 = scalar_lea.vmem [#allocation6], %s201
        // Predicated region
        $region37: #{tpu_custom_call.1} parent=31 // pred_check
          %p203 = pneg %p92
        $region38: #{tpu_custom_call.1} parent=31 // pred_check_branch
          %205 = sbr.rel (%p203) target = $region40
        $region39: #{tpu_custom_call.1} parent=31 // pred_region
          %206 = dma.done %s199, 64
        $region40: #{tpu_custom_call.1} parent=31 // pred_fallthru
          _
        %p207 = pneg %p40
        %p208 = pneg %p37
        %s209 = sand.u32 %s53, 1
        %s210 = scalar_lea.sflag [#allocation4], %s209
        %s211 = sand.u32 %s53, 1
        %s212 = smul.addr %s211, 8
        %s213 = scalar_lea.vmem [#allocation3], %s212
        %p214 = pneg %p66
        %p215 = pneg %p63
        %s216 = sand.u32 %s79, 1
        %s217 = scalar_lea.sflag [#allocation7], %s216
        %s218 = sand.u32 %s79, 1
        %s219 = smul.addr %s218, 4
        %s220 = scalar_lea.vmem [#allocation6], %s219
        %p221 = pneg %p92
        %p222 = pneg %p89
        %p223 = pneg %p118
        %p224 = pneg %p115
        %s225 = sand.u32 %s105, 1
        %s226 = scalar_lea.sflag [#allocation5], %s225
        %s227 = sand.u32 %s105, 1
        %s228 = smul.addr %s227, 8
        %s229 = scalar_lea.vmem [#allocation8], %s228
        %s230 = smul.u32 4, %s24
        %s231 = smul.u32 4, %s24
        %s232 = smul.u32 4, %s24
        %v233 = vld [vmem:[%s193] sm:$0x3]
        %v234 = vld [vmem:[%s193 + $0x2] sm:$0x3]
        %v235 = vld [vmem:[%s193 + $0x4] sm:$0x3]
        %v236 = vld [vmem:[%s193 + $0x6] sm:$0x3]
        %v237 = vld [vmem:[%s202] sm:$0x1]
        %v238 = vld [vmem:[%s202 + $0x1] sm:$0x1]
        %v239 = vld [vmem:[%s202 + $0x2] sm:$0x1]
        %v240 = vld [vmem:[%s202 + $0x3] sm:$0x1]
        %v245 = vlaneseq
        %v246 = vshrl.u32 %v245, 7
        %v247 = vsub.s32 0, %v246
        %v248 = vrot.slane %v237, %v247
        %v249 = vlaneseq
        %v250 = vshrl.u32 %v249, 7
        %v251 = vsub.s32 0, %v250
        %v252 = vrot.slane %v238, %v251
        %v253 = vlaneseq
        %v254 = vshrl.u32 %v253, 7
        %v255 = vsub.s32 0, %v254
        %v256 = vrot.slane %v239, %v255
        %v257 = vlaneseq
        %v258 = vshrl.u32 %v257, 7
        %v259 = vsub.s32 0, %v258
        %v260 = vrot.slane %v240, %v259
        %v265 = vadd.f32 %v233, %v248
        %v266 = vadd.f32 %v234, %v252
        %v267 = vadd.f32 %v235, %v256
        %v268 = vadd.f32 %v236, %v260
        %vm269 = vcmask 254976
        %270 = vst.msk [vmem:[%s229] sm:$0x3] %vm269, %v265
        %271 = vst.msk [vmem:[%s229 + $0x2] sm:$0x3] %vm269, %v266
        %272 = vst.msk [vmem:[%s229 + $0x4] sm:$0x3] %vm269, %v267
        %273 = vst.msk [vmem:[%s229 + $0x6] sm:$0x3] %vm269, %v268
        %s274 = sand.u32 %s105, 1
        %s275 = scalar_lea.sflag [#allocation5], %s274
        %s276 = sand.u32 %s105, 1
        %s277 = smul.addr %s276, 8
        %s278 = scalar_lea.vmem [#allocation8], %s277
        // Predicated region
        $region41: #{tpu_custom_call.1} parent=31 // pred_check
          %p279 = pneg %p115
        $region42: #{tpu_custom_call.1} parent=31 // pred_check_branch
          %281 = sbr.rel (%p279) target = $region44
        $region43: #{tpu_custom_call.1} parent=31 // pred_region
          %s282 = smul.u32 4, %s24
          %s284 = ssub.s32 128, 128
          %285 = vsyncadd %s275, %s284
          %s286 = smul.addr %s282, 32
          %s287 = scalar_lea.hbm %s3, %s286
          %s288 = sshll.u32 %s278, 4
          %s289 = int_to_ptr.vmem [resolvable:$true] %s288
          %294 = dma.vmem_to_hbm [thread:$0]  %s289, 128, %s287, %s275, 32, 32, 2
        $region44: #{tpu_custom_call.1} parent=31 // pred_fallthru
          _
      $region32: #{tpu_custom_call.1} parent=5 // pred_fallthru
        _
      %p295 = scmp.le.s32.totalorder 2, %s19
      // Predicated region
      $region45: #{tpu_custom_call.1} parent=5 // pred_check
        %p296 = pneg %p295
      $region46: #{tpu_custom_call.1} parent=5 // pred_check_branch
        %298 = sbr.rel (%p296) target = $region48
      $region47: #{tpu_custom_call.1} parent=5 // pred_region
        %s299 = ssub.s32 %s19, 2
        // Predicated region
        $region49: #{tpu_custom_call.1} parent=47 // pred_check
          %p300 = pneg %p121
        $region50: #{tpu_custom_call.1} parent=47 // pred_check_branch
          %302 = sbr.rel (%p300) target = $region52
        $region51: #{tpu_custom_call.1} parent=47 // pred_region
          %s303 = sand.u32 %s106, 1
          %s304 = scalar_lea.sflag [#allocation5], %s303
          %s305 = sand.u32 %s106, 1
          %s306 = smul.addr %s305, 8
          %s307 = scalar_lea.vmem [#allocation8], %s306
          %308 = dma.done %s304, 128
        $region52: #{tpu_custom_call.1} parent=47 // pred_fallthru
          _
      $region48: #{tpu_custom_call.1} parent=5 // pred_fallthru
        _
    $region6: #{tpu_custom_call.1} parent=1 // loop_footer
      %s23 = sadd.s32 1, %s19
    $region7: #{tpu_custom_call.1} parent=1 // loop_footer_branch
      %18 = sbr.rel target = $region3
    $region8: #{tpu_custom_call.1} parent=1 // loop_exit
      _
    %309 = vsyncpa [#allocation4], 1
    %s310 = scalar_lea.sflag [#allocation4], 1
    %311 = vsyncpa %s310, 1
    %312 = vsyncpa [#allocation7], 1
    %s313 = scalar_lea.sflag [#allocation7], 1
    %314 = vsyncpa %s313, 1
    %315 = vsyncpa [#allocation5], 1
    %s316 = scalar_lea.sflag [#allocation5], 1
    %317 = vsyncpa %s316, 1

</llo_original>
